<compile_context>
chip_gen: v6e
topology: v6e:2x2x1
jax: 0.10.0
libtpu: 0.0.40
codegen_flags: <defaults>
</compile_context>

<pallas_src>
import jax
import jax.numpy as jnp
from jax.experimental import pallas as pl
from jax.experimental.pallas import tpu as pltpu


def _round_up(x, m):
    return (x + m - 1) // m * m


# ------------------------------ kernels ------------------------------

def gnn1_kernel(adj_ref, feat_ref, w1_ref, b1_ref, h1_ref):
    adj = adj_ref[...]                                            # [TM, Np]
    # adj @ (feat @ W1 + b1) == (adj @ feat) @ W1 + rowsum(adj) * b1
    rowsum = jnp.sum(adj, axis=-1, keepdims=True)                 # [TM, 1]  (XLU)
    agg = jnp.dot(adj, feat_ref[...],
                  preferred_element_type=jnp.float32)             # [TM, Fp]
    seq = jnp.dot(agg, w1_ref[...],
                  preferred_element_type=jnp.float32)             # [TM, Hp]
    h1_ref[...] = jnp.tanh(seq + rowsum * b1_ref[...])


def gnn2_critic_kernel(adj_ref, h1_ref, w2_ref, b2_ref, wc_ref, bc_ref, out_ref):
    adj = adj_ref[...]                                            # [TM, Np]
    rowsum = jnp.sum(adj, axis=-1, keepdims=True)                 # [TM, 1]
    agg = jnp.dot(adj, h1_ref[...],
                  preferred_element_type=jnp.float32)             # [TM, Hp]
    seq = jnp.dot(agg, w2_ref[...],
                  preferred_element_type=jnp.float32)             # [TM, Hp]
    h2 = jnp.tanh(seq + rowsum * b2_ref[...])
    # Critic head: VPU multiply + cross-lane reduce (keeps MXU free; a [*,1]
    # matmul would use <1% of the MXU).
    out_ref[...] = (jnp.sum(h2 * wc_ref[...], axis=-1, keepdims=True)
                    + bc_ref[0, 0])                               # [TM, 1]


# ------------------------------ wrapper ------------------------------

def dvn_forward(feat, adj, params, *, max_tile_rows=256):
    """feat: [N, F] f32, adj: [N, N] f32 -> [N, 1] f32."""
    w1, b1, w2, b2, wc, bc = params
    N, F = feat.shape
    H = w1.shape[1]
    f32 = jnp.float32

    # Lane-pad feature / hidden dims to 128 (zero padding is exact for this model).
    Fp = _round_up(F, 128)
    Hp = _round_up(H, 128)

    # Row-tile size: keep 2 double-buffered (TM, Np) f32 adj slabs under ~24 MiB
    # so the kernel fits v7x's 64 MiB VMEM as well as v5e/v6e.
    n8 = _round_up(N, 8)
    adj_slab_budget = 24 * 1024 * 1024
    tm_cap = max(8, (adj_slab_budget // (2 * 4 * n8)) // 8 * 8)
    TM = int(min(max_tile_rows, tm_cap, n8))
    Np = _round_up(N, TM)
    grid = (Np // TM,)

    # Zero-padded operands (padded rows/cols contribute exactly zero).
    feat_p = jnp.zeros((Np, Fp), f32).at[:N, :F].set(feat.astype(f32))
    adj_p = jnp.zeros((Np, Np), f32).at[:N, :N].set(adj.astype(f32))
    w1_p = jnp.zeros((Fp, Hp), f32).at[:F, :H].set(w1.astype(f32))
    b1_p = jnp.zeros((1, Hp), f32).at[:, :H].set(b1.reshape(1, H).astype(f32))
    w2_p = jnp.zeros((Hp, Hp), f32).at[:H, :H].set(w2.astype(f32))
    b2_p = jnp.zeros((1, Hp), f32).at[:, :H].set(b2.reshape(1, H).astype(f32))
    wc_p = jnp.zeros((1, Hp), f32).at[:, :H].set(wc.reshape(1, H).astype(f32))
    bc_p = bc.reshape(1, 1).astype(f32)

    compiler_params = pltpu.CompilerParams(
        dimension_semantics=("parallel",),        # shard row tiles across TCs (v7x)
        vmem_limit_bytes=48 * 1024 * 1024,        # explicit budget (< v7x 64 MiB)
    )

    row_slab = pl.BlockSpec((TM, Np), lambda i: (i, 0))      # streamed adj rows
    full2d = lambda shape: pl.BlockSpec(shape, lambda i: (0, 0))  # grid-invariant block

    # ---- layer 1: h1 = tanh(adj @ (feat @ W1 + b1)) ----
    h1 = pl.pallas_call(
        gnn1_kernel,
        out_shape=jax.ShapeDtypeStruct((Np, Hp), f32),
        grid=grid,
        in_specs=[
            row_slab,                 # adj row slab   [TM, Np]
            full2d((Np, Fp)),         # feat (full)
            full2d((Fp, Hp)),         # W1 (pre-transposed [in, out])
            full2d((1, Hp)),          # b1
        ],
        out_specs=pl.BlockSpec((TM, Hp), lambda i: (i, 0)),
        compiler_params=compiler_params,
    )(adj_p, feat_p, w1_p, b1_p)

    # ---- layer 2 + critic head ----
    out = pl.pallas_call(
        gnn2_critic_kernel,
        out_shape=jax.ShapeDtypeStruct((Np, 1), f32),
        grid=grid,
        in_specs=[
            row_slab,                 # adj row slab   [TM, Np]
            full2d((Np, Hp)),         # h1 (full)
            full2d((Hp, Hp)),         # W2
            full2d((1, Hp)),          # b2
            full2d((1, Hp)),          # Wc as row vector
            pl.BlockSpec(memory_space=pltpu.MemorySpace.SMEM),   # bc scalar in SMEM
        ],
        out_specs=pl.BlockSpec((TM, 1), lambda i: (i, 0)),
        compiler_params=compiler_params,
    )(adj_p, h1, w2_p, b2_p, wc_p, bc_p)

    return out[:N]


# ------------------------------ reference / init ------------------------------

def init_params(key, feat_space, hidden_size):
    """Deterministic synthetic init (stand-in for init_(nn.Linear(...)))."""
    k1, k2, k3 = jax.random.split(key, 3)
    w1 = jax.random.normal(k1, (feat_space, hidden_size), jnp.float32) * 0.1
    b1 = jnp.zeros((1, hidden_size), jnp.float32)
    w2 = jax.random.normal(k2, (hidden_size, hidden_size), jnp.float32) * 0.1
    b2 = jnp.zeros((1, hidden_size), jnp.float32)
    wc = jax.random.normal(k3, (hidden_size, 1), jnp.float32) * 0.1
    bc = jnp.zeros((1, 1), jnp.float32)
    return (w1, b1, w2, b2, wc, bc)


def dvn_reference(feat, adj, params):
    """Pure-JAX reference mirroring the PyTorch forward."""
    w1, b1, w2, b2, wc, bc = params
    h1 = jnp.tanh(adj @ (feat @ w1 + b1))
    h2 = jnp.tanh(adj @ (h1 @ w2 + b2))
    return h2 @ wc + bc


if __name__ == "__main__":
    # Small shapes consistent with the module: N nodes, feat_space, hidden.
    N, FEAT_SPACE, HIDDEN = 16, 8, 32

    key = jax.random.PRNGKey(0)
    kf, ka, kp = jax.random.split(key, 3)

    feat = jax.random.normal(kf, (N, FEAT_SPACE), jnp.float32)
    # Adjacency-like matrix (values don't need to be 0/1 for the math).
    adj = jax.random.uniform(ka, (N, N), jnp.float32)

    params = init_params(kp, FEAT_SPACE, HIDDEN)

    out = dvn_forward(feat, adj, params)
    out = jax.block_until_ready(out)

    ref = dvn_reference(feat, adj, params)
    assert out.shape == (N, 1), out.shape
    assert jnp.allclose(out, ref, atol=1e-4, rtol=1e-4), "mismatch vs reference"

    print("KERNEL_OK")
</pallas_src>

<mosaic_0001>
module attributes {stable_mosaic.version = 11 : i64} {
  func.func @gnn1_kernel(%arg0: i32, %arg1: memref<16x16xf32, #tpu.memory_space<vmem>>, %arg2: memref<16x128xf32, #tpu.memory_space<vmem>>, %arg3: memref<128x128xf32, #tpu.memory_space<vmem>>, %arg4: memref<1x128xf32, #tpu.memory_space<vmem>>, %arg5: memref<16x128xf32, #tpu.memory_space<vmem>>) attributes {dimension_semantics = [#tpu.dimension_semantics<parallel>], iteration_bounds = array<i64: 1>, scalar_prefetch = 0 : i64, scratch_operands = 0 : i64, tpu.core_type = #tpu.core_type<tc>, window_params = [{transform_indices = @transform_0, window_bounds = array<i64: 16, 16>}, {pipeline_mode = #tpu.pipeline_mode<synchronous>, transform_indices = @transform_1, window_bounds = array<i64: 16, 128>}, {pipeline_mode = #tpu.pipeline_mode<synchronous>, transform_indices = @transform_2, window_bounds = array<i64: 128, 128>}, {pipeline_mode = #tpu.pipeline_mode<synchronous>, transform_indices = @transform_3, window_bounds = array<i64: 1, 128>}, {transform_indices = @transform_4, window_bounds = array<i64: 16, 128>}]} {
    %c0 = arith.constant 0 : index
    %c0_0 = arith.constant 0 : index
    %0 = vector.load %arg1[%c0, %c0_0] : memref<16x16xf32, #tpu.memory_space<vmem>>, vector<16x16xf32>
    %cst = arith.constant dense<0.000000e+00> : vector<16xf32>
    %1 = vector.multi_reduction <add>, %0, %cst [1] : vector<16x16xf32> to vector<16xf32>
    %2 = vector.shape_cast %1 : vector<16xf32> to vector<16x1xf32>
    %c0_1 = arith.constant 0 : index
    %c0_2 = arith.constant 0 : index
    %3 = vector.load %arg2[%c0_1, %c0_2] : memref<16x128xf32, #tpu.memory_space<vmem>>, vector<16x128xf32>
    %cst_3 = arith.constant dense<0.000000e+00> : vector<16x128xf32>
    %4 = tpu.matmul %0, %3, %cst_3 {dimension_numbers = #tpu.dot_dimension_numbers<[1], [0], [0], [1], [0, 0, 1, 1], [], []>} : vector<16x16xf32>, vector<16x128xf32>, vector<16x128xf32> -> vector<16x128xf32>
    %c0_4 = arith.constant 0 : index
    %c0_5 = arith.constant 0 : index
    %5 = vector.load %arg3[%c0_4, %c0_5] : memref<128x128xf32, #tpu.memory_space<vmem>>, vector<128x128xf32>
    %cst_6 = arith.constant dense<0.000000e+00> : vector<16x128xf32>
    %6 = tpu.matmul %4, %5, %cst_6 {dimension_numbers = #tpu.dot_dimension_numbers<[1], [0], [0], [1], [0, 0, 1, 1], [], []>} : vector<16x128xf32>, vector<128x128xf32>, vector<16x128xf32> -> vector<16x128xf32>
    %c0_7 = arith.constant 0 : index
    %c0_8 = arith.constant 0 : index
    %7 = vector.load %arg4[%c0_7, %c0_8] : memref<1x128xf32, #tpu.memory_space<vmem>>, vector<1x128xf32>
    %8 = vector.broadcast %2 : vector<16x1xf32> to vector<16x128xf32>
    %9 = vector.broadcast %7 : vector<1x128xf32> to vector<16x128xf32>
    %10 = arith.mulf %8, %9 : vector<16x128xf32>
    %11 = arith.addf %6, %10 : vector<16x128xf32>
    %12 = math.tanh %11 : vector<16x128xf32>
    %c0_9 = arith.constant 0 : index
    %c0_10 = arith.constant 0 : index
    %13 = vector.load %arg5[%c0_9, %c0_10] : memref<16x128xf32, #tpu.memory_space<vmem>>, vector<16x128xf32>
    tpu.vector_store %arg5[%c0_9, %c0_10], %12 {strides = array<i32>} : memref<16x128xf32, #tpu.memory_space<vmem>>, vector<16x128xf32>,
    return
  }
  func.func @transform_0(%arg0: i32) -> (i32, i32) {
    %c0_i32 = arith.constant 0 : i32
    %c0_i32_0 = arith.constant 0 : i32
    return %arg0, %c0_i32 : i32, i32
  }
  func.func @transform_1(%arg0: i32) -> (i32, i32) {
    %c0_i32 = arith.constant 0 : i32
    %c0_i32_0 = arith.constant 0 : i32
    %c0_i32_1 = arith.constant 0 : i32
    return %c0_i32, %c0_i32_0 : i32, i32
  }
  func.func @transform_2(%arg0: i32) -> (i32, i32) {
    %c0_i32 = arith.constant 0 : i32
    %c0_i32_0 = arith.constant 0 : i32
    %c0_i32_1 = arith.constant 0 : i32
    return %c0_i32, %c0_i32_0 : i32, i32
  }
  func.func @transform_3(%arg0: i32) -> (i32, i32) {
    %c0_i32 = arith.constant 0 : i32
    %c0_i32_0 = arith.constant 0 : i32
    %c0_i32_1 = arith.constant 0 : i32
    return %c0_i32, %c0_i32_0 : i32, i32
  }
  func.func @transform_4(%arg0: i32) -> (i32, i32) {
    %c0_i32 = arith.constant 0 : i32
    %c0_i32_0 = arith.constant 0 : i32
    return %arg0, %c0_i32 : i32, i32
  }
}

</mosaic_0001>

<llo_original>
// kernel: tpu_custom_call.1
$region0: #{tpu_custom_call.1}
  #allocation0 [shape = 'u32[]', space=smem, size = 0x4, offset = 0x4, fixed_abs, tag = 'smem constant byte address 0x4 - core index']
  #allocation1 [shape = 'u32[144,128]{1,0:T(1,128)}', space=vmem, size = 0x12000, scoped, tag = 'internal scratch']
  %s0 = inlined_call_operand.hbm [shape: f32[16,16], index: 0, kind: input, shape index: {}]
  %s1 = inlined_call_operand.hbm [shape: f32[16,128], index: 1, kind: input, shape index: {}]
  %s2 = inlined_call_operand.hbm [shape: f32[128,128], index: 2, kind: input, shape index: {}]
  %s3 = inlined_call_operand.vmem [shape: f32[1,128], index: 3, kind: input, shape index: {}]
  %s4 = inlined_call_operand.hbm [shape: f32[16,128], index: 4, kind: output, shape index: {}]
  %s5 = sld [smem:[#allocation0]]
  $region38: #{tpu_custom_call.1} parent=0
    _
  %s7 = ssub.s32 1, %s5
  %s8 = scalar_select 0, %s7, %s5
  $region1: #{tpu_custom_call.1} parent=0
    #allocation2 [shape = 'u8[8192]{0}', space=vmem, size = 0x2000, scoped, tag = 'input window, operand 0, single buffered']
    #allocation3 [shape = 's32[1]{0}', space=sflag, size = 0x4, scoped, tag = 'scoped memory for tpu_custom_call.1']
    #allocation4 [shape = 's32[1]{0}', space=sflag, size = 0x4, scoped, tag = 'scoped memory for tpu_custom_call.1']
    #allocation5 [shape = 'u8[8192]{0}', space=vmem, size = 0x2000, scoped, tag = 'input window, operand 1, single buffered']
    #allocation6 [shape = 's32[1]{0}', space=sflag, size = 0x4, scoped, tag = 'scoped memory for tpu_custom_call.1']
    #allocation7 [shape = 'u8[65536]{0}', space=vmem, size = 0x10000, scoped, tag = 'input window, operand 2, single buffered']
    #allocation8 [shape = 'u8[8192]{0}', space=vmem, size = 0x2000, scoped, tag = 'output window, operand 0, single buffered']
    %9 = vsyncpa [#allocation3], 0
    %10 = vsyncpa [#allocation6], 0
    %11 = vsyncpa [#allocation4], 0
    // Predicated region
    $region2: #{tpu_custom_call.1} parent=1 // pred_check
      _
    $region3: #{tpu_custom_call.1} parent=1 // pred_check_branch
      %13 = sbr.rel (0) target = $region5
    $region4: #{tpu_custom_call.1} parent=1 // pred_region
      %s15 = ssub.s32 256, 256
      %16 = vsyncadd [#allocation3], %s15
      %s17 = sshll.u32 [#allocation2], 4
      %s18 = int_to_ptr.vmem [resolvable:$true] %s17
      %23 = dma.hbm_to_vmem [thread:$0]  %s0, 256, %s18, [#allocation3], 128, 128, 8
    $region5: #{tpu_custom_call.1} parent=1 // pred_fallthru
      _
    // Predicated region
    $region6: #{tpu_custom_call.1} parent=1 // pred_check
      _
    $region7: #{tpu_custom_call.1} parent=1 // pred_check_branch
      %25 = sbr.rel (0) target = $region9
    $region8: #{tpu_custom_call.1} parent=1 // pred_region
      %s27 = ssub.s32 256, 256
      %28 = vsyncadd [#allocation6], %s27
      %s29 = sshll.u32 [#allocation5], 4
      %s30 = int_to_ptr.vmem [resolvable:$true] %s29
      %35 = dma.hbm_to_vmem [thread:$0]  %s1, 256, %s30, [#allocation6], 128, 128, 8
    $region9: #{tpu_custom_call.1} parent=1 // pred_fallthru
      _
    // Predicated region
    $region10: #{tpu_custom_call.1} parent=1 // pred_check
      _
    $region11: #{tpu_custom_call.1} parent=1 // pred_check_branch
      %37 = sbr.rel (0) target = $region13
    $region12: #{tpu_custom_call.1} parent=1 // pred_region
      %s39 = ssub.s32 2048, 2048
      %40 = vsyncadd [#allocation6], %s39
      %s41 = sshll.u32 [#allocation7], 4
      %s42 = int_to_ptr.vmem [resolvable:$true] %s41
      %47 = dma.hbm_to_vmem [thread:$0]  %s2, 2048, %s42, [#allocation6], 128, 128, 8
    $region13: #{tpu_custom_call.1} parent=1 // pred_fallthru
      _
    // Predicated region
    $region14: #{tpu_custom_call.1} parent=1 // pred_check
      _
    $region15: #{tpu_custom_call.1} parent=1 // pred_check_branch
      %49 = sbr.rel (0) target = $region17
    $region16: #{tpu_custom_call.1} parent=1 // pred_region
      _
    $region17: #{tpu_custom_call.1} parent=1 // pred_fallthru
      _
    // Predicated region
    $region18: #{tpu_custom_call.1} parent=1 // pred_check
      _
    $region19: #{tpu_custom_call.1} parent=1 // pred_check_branch
      %51 = sbr.rel (0) target = $region21
    $region20: #{tpu_custom_call.1} parent=1 // pred_region
      %52 = dma.done [#allocation3], 256
    $region21: #{tpu_custom_call.1} parent=1 // pred_fallthru
      _
    // Predicated region
    $region22: #{tpu_custom_call.1} parent=1 // pred_check
      _
    $region23: #{tpu_custom_call.1} parent=1 // pred_check_branch
      %54 = sbr.rel (0) target = $region25
    $region24: #{tpu_custom_call.1} parent=1 // pred_region
      %55 = dma.done [#allocation6], 256
    $region25: #{tpu_custom_call.1} parent=1 // pred_fallthru
      _
    // Predicated region
    $region26: #{tpu_custom_call.1} parent=1 // pred_check
      _
    $region27: #{tpu_custom_call.1} parent=1 // pred_check_branch
      %57 = sbr.rel (0) target = $region29
    $region28: #{tpu_custom_call.1} parent=1 // pred_region
      %58 = dma.done [#allocation6], 2048
    $region29: #{tpu_custom_call.1} parent=1 // pred_fallthru
      _
    %v59 = vld [vmem:[#allocation2] sm:$0xff]
    %v60 = vld [vmem:[#allocation2 + $0x8] sm:$0xff]
    %vm61 = vcmask 130048
    %v62 = vsel %vm61, %v59, 0.0
    %63 = vadd.xlane.f32.xlu0 %v62
    %v64 = vpop.xlane.xlu0 %63
    %v65 = vsel %vm61, %v60, 0.0
    %66 = vadd.xlane.f32.xlu0 %v65
    %v67 = vpop.xlane.xlu0 %66
    %v68 = vld [vmem:[#allocation5] sm:$0xff]
    %v69 = vld [vmem:[#allocation5 + $0x8] sm:$0xff]
    %v71 = vsel %vm61, %v59, 0
    %v74 = vsel %vm61, %v60, 0
    %76 = vmatprep.subr.mxu0 0.0
    %77 = vmatpush1.msra.mxu0 0.0
    %78 = vmatprep.subr.mxu0 0.0
    %79 = vmatpush1.msra.mxu0 0.0
    %80 = vmatprep.subr.mxu0 0.0
    %81 = vmatpush1.msra.mxu0 0.0
    %82 = vmatprep.subr.mxu0 0.0
    %83 = vmatpush1.msra.mxu0 0.0
    %84 = vmatprep.subr.mxu0 0.0
    %85 = vmatpush1.msra.mxu0 0.0
    %86 = vmatprep.subr.mxu0 0.0
    %87 = vmatpush1.msra.mxu0 0.0
    %88 = vmatprep.subr.mxu0 0.0
    %89 = vmatpush1.msra.mxu0 0.0
    %90 = vmatprep.subr.mxu0 0.0
    %91 = vmatpush1.msra.mxu0 0.0
    %92 = vmatprep.subr.mxu0 0.0
    %93 = vmatpush1.msra.mxu0 0.0
    %94 = vmatprep.subr.mxu0 0.0
    %95 = vmatpush1.msra.mxu0 0.0
    %96 = vmatprep.subr.mxu0 0.0
    %97 = vmatpush1.msra.mxu0 0.0
    %98 = vmatprep.subr.mxu0 0.0
    %99 = vmatpush1.msra.mxu0 0.0
    %100 = vmatprep.subr.mxu0 0.0
    %101 = vmatpush1.msra.mxu0 0.0
    %102 = vmatprep.subr.mxu0 0.0
    %103 = vmatpush1.msra.mxu0 0.0
    %104 = vmatprep.subr.mxu0 0.0
    %105 = vmatpush1.msra.mxu0 %v69
    %106 = vmatprep.subr.mxu0 0.0
    %107 = vmatpush1.msra.mxu0 %v68
    %108 = vmatprep.subr.mxu0 0.0
    %109 = vmatpush2.msra.mxu0 0.0
    %110 = vmatprep.subr.mxu0 0.0
    %111 = vmatpush2.msra.mxu0 0.0
    %112 = vmatprep.subr.mxu0 0.0
    %113 = vmatpush2.msra.mxu0 0.0
    %114 = vmatprep.subr.mxu0 0.0
    %115 = vmatpush2.msra.mxu0 0.0
    %116 = vmatprep.subr.mxu0 0.0
    %117 = vmatpush2.msra.mxu0 0.0
    %118 = vmatprep.subr.mxu0 0.0
    %119 = vmatpush2.msra.mxu0 0.0
    %120 = vmatprep.subr.mxu0 0.0
    %121 = vmatpush2.msra.mxu0 0.0
    %122 = vmatprep.subr.mxu0 0.0
    %123 = vmatpush2.msra.mxu0 0.0
    %124 = vmatprep.subr.mxu0 0.0
    %125 = vmatpush2.msra.mxu0 0.0
    %126 = vmatprep.subr.mxu0 0.0
    %127 = vmatpush2.msra.mxu0 0.0
    %128 = vmatprep.subr.mxu0 0.0
    %129 = vmatpush2.msra.mxu0 0.0
    %130 = vmatprep.subr.mxu0 0.0
    %131 = vmatpush2.msra.mxu0 0.0
    %132 = vmatprep.subr.mxu0 0.0
    %133 = vmatpush2.msra.mxu0 0.0
    %134 = vmatprep.subr.mxu0 0.0
    %135 = vmatpush2.msra.mxu0 0.0
    %136 = vmatprep.subr.mxu0 0.0
    %137 = vmatpush2.msra.mxu0 0.0
    %138 = vmatprep.subr.mxu0 0.0
    %139 = vmatpush2.msra.mxu0 0.0
    %140 = vmatprep.mubr.f32.mxu0 0.0
    %141 = vmatmul.mubr.f32.gmra.mxu0 %v71
    %v142 = vpop.f32.mrf.mxu0
    %v143 = vadd.f32 0.0, %v142
    %v144 = vpop.f32.mrf.mxu0
    %145 = vmatprep.mubr.f32.mxu0 0.0
    %146 = vmatmul.mubr.f32.gmra.mxu0 %v74
    %v147 = vpop.f32.mrf.mxu0
    %v148 = vadd.f32 0.0, %v147
    %v149 = vpop.f32.mrf.mxu0
    %150 = vdwg.mxu0
    %v151 = vld [vmem:[#allocation7] sm:$0xff]
    %v152 = vld [vmem:[#allocation7 + $0x8] sm:$0xff]
    %v153 = vld [vmem:[#allocation7 + $0x10] sm:$0xff]
    %v154 = vld [vmem:[#allocation7 + $0x18] sm:$0xff]
    %v155 = vld [vmem:[#allocation7 + $0x20] sm:$0xff]
    %v156 = vld [vmem:[#allocation7 + $0x28] sm:$0xff]
    %v157 = vld [vmem:[#allocation7 + $0x30] sm:$0xff]
    %v158 = vld [vmem:[#allocation7 + $0x38] sm:$0xff]
    %v159 = vld [vmem:[#allocation7 + $0x40] sm:$0xff]
    %v160 = vld [vmem:[#allocation7 + $0x48] sm:$0xff]
    %v161 = vld [vmem:[#allocation7 + $0x50] sm:$0xff]
    %v162 = vld [vmem:[#allocation7 + $0x58] sm:$0xff]
    %v163 = vld [vmem:[#allocation7 + $0x60] sm:$0xff]
    %v164 = vld [vmem:[#allocation7 + $0x68] sm:$0xff]
    %v165 = vld [vmem:[#allocation7 + $0x70] sm:$0xff]
    %v166 = vld [vmem:[#allocation7 + $0x78] sm:$0xff]
    %v167 = vld [vmem:[%s3] sm:$0x1]
    %v169 = vlaneseq
    %v170 = vshrl.u32 %v169, 7
    %v171 = vsub.s32 0, %v170
    %v172 = vrot.slane %v167, %v171
    %v174 = vmul.f32 %v64, %v172
    %v175 = vmul.f32 %v67, %v172
    %176 = vmatprep.subr.mxu0 0.0
    %177 = vmatpush1.msra.mxu0 %v166
    %178 = vmatprep.subr.mxu0 0.0
    %179 = vmatpush1.msra.mxu0 %v165
    %180 = vmatprep.subr.mxu0 0.0
    %181 = vmatpush1.msra.mxu0 %v164
    %182 = vmatprep.subr.mxu0 0.0
    %183 = vmatpush1.msra.mxu0 %v163
    %184 = vmatprep.subr.mxu0 0.0
    %185 = vmatpush1.msra.mxu0 %v162
    %186 = vmatprep.subr.mxu0 0.0
    %187 = vmatpush1.msra.mxu0 %v161
    %188 = vmatprep.subr.mxu0 0.0
    %189 = vmatpush1.msra.mxu0 %v160
    %190 = vmatprep.subr.mxu0 0.0
    %191 = vmatpush1.msra.mxu0 %v159
    %192 = vmatprep.subr.mxu0 0.0
    %193 = vmatpush1.msra.mxu0 %v158
    %194 = vmatprep.subr.mxu0 0.0
    %195 = vmatpush1.msra.mxu0 %v157
    %196 = vmatprep.subr.mxu0 0.0
    %197 = vmatpush1.msra.mxu0 %v156
    %198 = vmatprep.subr.mxu0 0.0
    %199 = vmatpush1.msra.mxu0 %v155
    %200 = vmatprep.subr.mxu0 0.0
    %201 = vmatpush1.msra.mxu0 %v154
    %202 = vmatprep.subr.mxu0 0.0
    %203 = vmatpush1.msra.mxu0 %v153
    %204 = vmatprep.subr.mxu0 0.0
    %205 = vmatpush1.msra.mxu0 %v152
    %206 = vmatprep.subr.mxu0 0.0
    %207 = vmatpush1.msra.mxu0 %v151
    %208 = vmatprep.subr.mxu0 0.0
    %209 = vmatpush2.msra.mxu0 0.0
    %210 = vmatprep.subr.mxu0 0.0
    %211 = vmatpush2.msra.mxu0 0.0
    %212 = vmatprep.subr.mxu0 0.0
    %213 = vmatpush2.msra.mxu0 0.0
    %214 = vmatprep.subr.mxu0 0.0
    %215 = vmatpush2.msra.mxu0 0.0
    %216 = vmatprep.subr.mxu0 0.0
    %217 = vmatpush2.msra.mxu0 0.0
    %218 = vmatprep.subr.mxu0 0.0
    %219 = vmatpush2.msra.mxu0 0.0
    %220 = vmatprep.subr.mxu0 0.0
    %221 = vmatpush2.msra.mxu0 0.0
    %222 = vmatprep.subr.mxu0 0.0
    %223 = vmatpush2.msra.mxu0 0.0
    %224 = vmatprep.subr.mxu0 0.0
    %225 = vmatpush2.msra.mxu0 0.0
    %226 = vmatprep.subr.mxu0 0.0
    %227 = vmatpush2.msra.mxu0 0.0
    %228 = vmatprep.subr.mxu0 0.0
    %229 = vmatpush2.msra.mxu0 0.0
    %230 = vmatprep.subr.mxu0 0.0
    %231 = vmatpush2.msra.mxu0 0.0
    %232 = vmatprep.subr.mxu0 0.0
    %233 = vmatpush2.msra.mxu0 0.0
    %234 = vmatprep.subr.mxu0 0.0
    %235 = vmatpush2.msra.mxu0 0.0
    %236 = vmatprep.subr.mxu0 0.0
    %237 = vmatpush2.msra.mxu0 0.0
    %238 = vmatprep.subr.mxu0 0.0
    %239 = vmatpush2.msra.mxu0 0.0
    %240 = vmatprep.mubr.f32.mxu0 0.0
    %241 = vmatmul.mubr.f32.gmra.mxu0 %v143
    %v242 = vpop.f32.mrf.mxu0
    %v243 = vadd.f32 %v174, %v242
    %v244 = vpop.f32.mrf.mxu0
    %245 = vmatprep.mubr.f32.mxu0 0.0
    %246 = vmatmul.mubr.f32.gmra.mxu0 %v148
    %v247 = vpop.f32.mrf.mxu0
    %v248 = vadd.f32 %v175, %v247
    %v249 = vpop.f32.mrf.mxu0
    %250 = vdwg.mxu0
    %v251 = vtanh.pop %v243
    %v252 = vtanh.pop %v248
    %253 = vst [vmem:[#allocation8] sm:$0xff] %v251
    %254 = vst [vmem:[#allocation8 + $0x8] sm:$0xff] %v252
    // Predicated region
    $region30: #{tpu_custom_call.1} parent=1 // pred_check
      _
    $region31: #{tpu_custom_call.1} parent=1 // pred_check_branch
      %256 = sbr.rel (0) target = $region33
    $region32: #{tpu_custom_call.1} parent=1 // pred_region
      %s258 = ssub.s32 256, 256
      %259 = vsyncadd [#allocation4], %s258
      %s260 = sshll.u32 [#allocation8], 4
      %s261 = int_to_ptr.vmem [resolvable:$true] %s260
      %266 = dma.vmem_to_hbm [thread:$0]  %s261, 256, %s4, [#allocation4], 128, 128, 8
    $region33: #{tpu_custom_call.1} parent=1 // pred_fallthru
      _
    // Predicated region
    $region34: #{tpu_custom_call.1} parent=1 // pred_check
      _
    $region35: #{tpu_custom_call.1} parent=1 // pred_check_branch
      %268 = sbr.rel (0) target = $region37
    $region36: #{tpu_custom_call.1} parent=1 // pred_region
      %269 = dma.done [#allocation4], 256
    $region37: #{tpu_custom_call.1} parent=1 // pred_fallthru
      _
    %270 = vsyncpa [#allocation3], 1
    %271 = vsyncpa [#allocation6], 1
    %272 = vsyncpa [#allocation4], 1

</llo_original>
